<compile_context>
chip_gen: v5e
topology: v5e:2x2
jax: 0.10.0
libtpu: 0.0.40
codegen_flags: <defaults>
</compile_context>

<pallas_src>
import functools
import math

import jax
import jax.numpy as jnp
from jax.experimental import pallas as pl
from jax.experimental.pallas import tpu as pltpu

DTYPE = jnp.float32          # activation / accumulation / LN dtype
WDTYPE = jnp.bfloat16        # weight storage dtype (MXU operands)
VMEM_LIMIT = 64 * 1024 * 1024


def _pick(dim, target, quantum):
    """Largest tile <= target that divides dim and is a multiple of `quantum`;
    falls back to the full dim (a full-extent block is always legal)."""
    if dim <= target:
        return dim
    t = (target // quantum) * quantum
    while t >= quantum:
        if dim % t == 0:
            return t
        t -= quantum
    return dim


# ----------------------------- Pallas kernels ------------------------------ #
def _linear_kernel(x_ref, w_ref, b_ref, o_ref, acc_ref, *, activation):
    k = pl.program_id(2)

    @pl.when(k == 0)
    def _():
        acc_ref[...] = jnp.zeros_like(acc_ref)

    acc_ref[...] += jnp.dot(
        x_ref[...].astype(jnp.bfloat16),
        w_ref[...].astype(jnp.bfloat16),
        preferred_element_type=jnp.float32,
    )

    @pl.when(k == pl.num_programs(2) - 1)
    def _():
        y = acc_ref[...] + b_ref[...].astype(jnp.float32)
        if activation == "gelu":
            # TODO(synk): HF BERT uses exact (erf) gelu; tanh approximation used here.
            y = 0.5 * y * (1.0 + jnp.tanh(0.7978845608028654 * (y + 0.044715 * y * y * y)))
        o_ref[...] = y.astype(o_ref.dtype)


def linear(x, w, b, activation=None, tm_target=256, tn_target=256, tk_target=512):
    """x: (M, K) f32 @ w: (K, N) bf16 + b: (N,) f32 -> (M, N) f32, optional fused GELU."""
    M, K = x.shape
    N = w.shape[1]
    tm = _pick(M, tm_target, 8)
    tn = _pick(N, tn_target, 128)
    tk = _pick(K, tk_target, 128)
    grid = (M // tm, N // tn, K // tk)
    cost = pl.CostEstimate(
        flops=2 * M * N * K,
        transcendentals=(M * N) if activation == "gelu" else 0,
        bytes_accessed=int(x.size * x.dtype.itemsize
                           + w.size * w.dtype.itemsize
                           + M * N * jnp.dtype(DTYPE).itemsize),
    )
    return pl.pallas_call(
        functools.partial(_linear_kernel, activation=activation),
        out_shape=jax.ShapeDtypeStruct((M, N), DTYPE),
        grid=grid,
        in_specs=[
            pl.BlockSpec((tm, tk), lambda i, j, k: (i, k)),
            pl.BlockSpec((tk, tn), lambda i, j, k: (k, j)),
            pl.BlockSpec((1, tn), lambda i, j, k: (0, j)),
        ],
        out_specs=pl.BlockSpec((tm, tn), lambda i, j, k: (i, j)),
        scratch_shapes=[pltpu.VMEM((tm, tn), jnp.float32)],
        compiler_params=pltpu.CompilerParams(
            dimension_semantics=("parallel", "parallel", "arbitrary"),
            vmem_limit_bytes=VMEM_LIMIT,
        ),
        cost_estimate=cost,
    )(x, w, b.reshape(1, N))


def _layernorm_kernel(x_ref, g_ref, b_ref, o_ref, *, eps):
    x = x_ref[...].astype(jnp.float32)
    mean = jnp.mean(x, axis=-1, keepdims=True)
    xc = x - mean
    var = jnp.mean(xc * xc, axis=-1, keepdims=True)
    inv = jax.lax.rsqrt(var + eps)
    o_ref[...] = (xc * inv * g_ref[...] + b_ref[...]).astype(o_ref.dtype)


def _add_layernorm_kernel(x_ref, r_ref, g_ref, b_ref, o_ref, *, eps):
    x = x_ref[...].astype(jnp.float32) + r_ref[...].astype(jnp.float32)  # fused residual
    mean = jnp.mean(x, axis=-1, keepdims=True)
    xc = x - mean
    var = jnp.mean(xc * xc, axis=-1, keepdims=True)
    inv = jax.lax.rsqrt(var + eps)
    o_ref[...] = (xc * inv * g_ref[...] + b_ref[...]).astype(o_ref.dtype)


def layernorm(x, gamma, beta, residual=None, eps=1e-12):
    """Row-tiled LayerNorm over the last axis, optional fused residual add."""
    M, H = x.shape
    tm = _pick(M, 256, 8)
    row_spec = pl.BlockSpec((tm, H), lambda i: (i, 0))
    vec_spec = pl.BlockSpec((1, H), lambda i: (0, 0))
    if residual is None:
        kern = functools.partial(_layernorm_kernel, eps=eps)
        in_specs = [row_spec, vec_spec, vec_spec]
        args = (x, gamma.reshape(1, H), beta.reshape(1, H))
    else:
        kern = functools.partial(_add_layernorm_kernel, eps=eps)
        in_specs = [row_spec, row_spec, vec_spec, vec_spec]
        args = (x, residual, gamma.reshape(1, H), beta.reshape(1, H))
    return pl.pallas_call(
        kern,
        out_shape=jax.ShapeDtypeStruct((M, H), DTYPE),
        grid=(M // tm,),
        in_specs=in_specs,
        out_specs=row_spec,
        compiler_params=pltpu.CompilerParams(
            dimension_semantics=("parallel",),
            vmem_limit_bytes=VMEM_LIMIT,
        ),
    )(*args)


def _attention_kernel(q_ref, k_ref, v_ref, m_ref, o_ref, m_sc, l_sc, acc_sc, *, scale):
    kv = pl.program_id(2)

    @pl.when(kv == 0)
    def _():
        m_sc[...] = jnp.full_like(m_sc, -jnp.inf)
        l_sc[...] = jnp.zeros_like(l_sc)
        acc_sc[...] = jnp.zeros_like(acc_sc)

    q = q_ref[...].astype(jnp.bfloat16)
    k = k_ref[...].astype(jnp.bfloat16)
    s = jnp.einsum("bqd,bkd->bqk", q, k, preferred_element_type=jnp.float32) * scale
    s = s + m_ref[...].astype(jnp.float32)        # additive mask, broadcast over queries

    m_new = jnp.maximum(m_sc[...], jnp.max(s, axis=-1, keepdims=True))
    alpha = jnp.exp(m_sc[...] - m_new)
    p = jnp.exp(s - m_new)
    l_sc[...] = alpha * l_sc[...] + jnp.sum(p, axis=-1, keepdims=True)
    acc_sc[...] = alpha * acc_sc[...] + jnp.einsum(
        "bqk,bkd->bqd",
        p.astype(jnp.bfloat16),
        v_ref[...].astype(jnp.bfloat16),
        preferred_element_type=jnp.float32,
    )
    m_sc[...] = m_new

    @pl.when(kv == pl.num_programs(2) - 1)
    def _():
        o_ref[...] = (acc_sc[...] * pl.reciprocal(l_sc[...], approx=True)).astype(o_ref.dtype)


def attention(q, k, v, addmask, scale, nh):
    """q/k/v: (B*nh, S, Dh); addmask: (B, 1, S) additive mask (indexed per-batch)."""
    BH, S, Dh = q.shape
    tq = _pick(S, 256, 8)
    tkv = _pick(S, 256, 128)
    grid = (BH, S // tq, S // tkv)
    qkv_spec = lambda tile: pl.BlockSpec((1, tile, Dh), None)  # placeholder (not used)
    return pl.pallas_call(
        functools.partial(_attention_kernel, scale=scale),
        out_shape=jax.ShapeDtypeStruct((BH, S, Dh), DTYPE),
        grid=grid,
        in_specs=[
            pl.BlockSpec((1, tq, Dh), lambda b, qi, ki: (b, qi, 0)),
            pl.BlockSpec((1, tkv, Dh), lambda b, qi, ki: (b, ki, 0)),
            pl.BlockSpec((1, tkv, Dh), lambda b, qi, ki: (b, ki, 0)),
            pl.BlockSpec((1, 1, tkv), lambda b, qi, ki: (b // nh, 0, ki)),
        ],
        out_specs=pl.BlockSpec((1, tq, Dh), lambda b, qi, ki: (b, qi, 0)),
        scratch_shapes=[
            pltpu.VMEM((1, tq, 1), jnp.float32),
            pltpu.VMEM((1, tq, 1), jnp.float32),
            pltpu.VMEM((1, tq, Dh), jnp.float32),
        ],
        compiler_params=pltpu.CompilerParams(
            dimension_semantics=("parallel", "parallel", "arbitrary"),
            vmem_limit_bytes=VMEM_LIMIT,
        ),
    )(q, k, v, addmask)


# ------------------------------ model glue --------------------------------- #
def init_params(key, cfg):
    H, I = cfg["hidden"], cfg["intermediate"]
    keys = iter(jax.random.split(key, 64))

    def dense(k, k_in, k_out):
        w = (jax.random.normal(k, (k_in, k_out), DTYPE) * 0.02).astype(WDTYPE)
        return w, jnp.zeros((k_out,), DTYPE)

    params = {
        "word_emb": jax.random.normal(next(keys), (cfg["vocab"], H), DTYPE) * 0.02,
        "pos_emb": jax.random.normal(next(keys), (cfg["max_pos"], H), DTYPE) * 0.02,
        "type_emb": jax.random.normal(next(keys), (cfg["type_vocab"], H), DTYPE) * 0.02,
        "emb_ln_g": jnp.ones((H,), DTYPE),
        "emb_ln_b": jnp.zeros((H,), DTYPE),
        "layers": [],
    }
    for _ in range(cfg["layers"]):
        lw = {}
        qw, qb = dense(next(keys), H, H)
        kw, kb = dense(next(keys), H, H)
        vw, vb = dense(next(keys), H, H)
        # fused QKV projection: one (H, 3H) GEMM per layer instead of three (H, H) GEMMs
        lw["qkv_w"] = jnp.concatenate([qw, kw, vw], axis=1)
        lw["qkv_b"] = jnp.concatenate([qb, kb, vb], axis=0)
        lw["ao_w"], lw["ao_b"] = dense(next(keys), H, H)
        lw["i_w"], lw["i_b"] = dense(next(keys), H, I)
        lw["o_w"], lw["o_b"] = dense(next(keys), I, H)
        lw["ln1_g"], lw["ln1_b"] = jnp.ones((H,), DTYPE), jnp.zeros((H,), DTYPE)
        lw["ln2_g"], lw["ln2_b"] = jnp.ones((H,), DTYPE), jnp.zeros((H,), DTYPE)
        params["layers"].append(lw)
    w, b = dense(next(keys), H, cfg["num_labels"])
    params["cls_w"], params["cls_b"] = w, b
    return params


def bert_classifier_forward(params, input_ids, attention_mask, cfg):
    B, S = input_ids.shape
    H = cfg["hidden"]
    nh = cfg["heads"]
    dh = H // nh

    # --- embeddings (gathers are XLA glue; layernorm is a Pallas kernel) ---
    we = params["word_emb"][input_ids]                   # (B, S, H)
    pe = params["pos_emb"][jnp.arange(S)][None, :, :]    # (1, S, H)
    te = params["type_emb"][0][None, None, :]            # token_type_ids = 0
    x = (we + pe + te).reshape(B * S, H)
    x = layernorm(x, params["emb_ln_g"], params["emb_ln_b"])
    # embedding dropout: identity at inference

    # extended additive attention mask, as in BertModel: (1 - mask) * -10000
    # kept at (B, 1, S); heads are mapped onto it via the BlockSpec index_map
    addmask = (1.0 - attention_mask.astype(DTYPE))[:, None, :] * -10000.0   # (B, 1, S)

    # NOTE: head split/merge stays in XLA — a dh-wide lane block (dh=64 for real BERT,
    # 16 here) violates the (8,128) BlockSpec rule unless dh equals the full last dim.
    def split_heads(t):
        return t.reshape(B, S, nh, dh).transpose(0, 2, 1, 3).reshape(B * nh, S, dh)

    scale = 1.0 / math.sqrt(dh)
    for lw in params["layers"]:
        qkv = linear(x, lw["qkv_w"], lw["qkv_b"])                      # (B*S, 3H)
        q, k, v = qkv[:, :H], qkv[:, H:2 * H], qkv[:, 2 * H:]
        ctx = attention(split_heads(q), split_heads(k), split_heads(v),
                        addmask, scale, nh)
        ctx = ctx.reshape(B, nh, S, dh).transpose(0, 2, 1, 3).reshape(B * S, H)
        attn_out = linear(ctx, lw["ao_w"], lw["ao_b"])
        x = layernorm(attn_out, lw["ln1_g"], lw["ln1_b"], residual=x)  # fused add + LN
        inter = linear(x, lw["i_w"], lw["i_b"], activation="gelu")
        ffn_out = linear(inter, lw["o_w"], lw["o_b"])
        x = layernorm(ffn_out, lw["ln2_g"], lw["ln2_b"], residual=x)   # fused add + LN

    hidden = x.reshape(B, S, H)
    pooled = hidden[:, 0, :]                 # outputs.last_hidden_state[:, 0, :]
    # nn.Dropout(0.3): identity in eval/inference mode
    logits = linear(pooled, params["cls_w"], params["cls_b"])
    return logits


if __name__ == "__main__":
    cfg = dict(vocab=128, hidden=32, layers=2, heads=2, intermediate=64,
               max_pos=16, type_vocab=2, num_labels=5)
    key = jax.random.PRNGKey(0)
    pkey, ikey = jax.random.split(key)
    params = init_params(pkey, cfg)

    B, S = 2, 8
    input_ids = jax.random.randint(ikey, (B, S), 0, cfg["vocab"], dtype=jnp.int32)
    attention_mask = jnp.array([[1, 1, 1, 1, 1, 1, 1, 1],
                                [1, 1, 1, 1, 1, 1, 0, 0]], dtype=jnp.int32)

    logits = bert_classifier_forward(params, input_ids, attention_mask, cfg)
    jax.block_until_ready(logits)
    assert logits.shape == (B, cfg["num_labels"]) and logits.dtype == DTYPE
    print("KERNEL_OK")
</pallas_src>

<mosaic_0001>
module attributes {stable_mosaic.version = 11 : i64} {
  func.func @_layernorm_kernel(%arg0: i32, %arg1: memref<16x32xf32, #tpu.memory_space<vmem>>, %arg2: memref<1x32xf32, #tpu.memory_space<vmem>>, %arg3: memref<1x32xf32, #tpu.memory_space<vmem>>, %arg4: memref<16x32xf32, #tpu.memory_space<vmem>>) attributes {dimension_semantics = [#tpu.dimension_semantics<parallel>], iteration_bounds = array<i64: 1>, scalar_prefetch = 0 : i64, scratch_operands = 0 : i64, tpu.core_type = #tpu.core_type<tc>, window_params = [{transform_indices = @transform_0, window_bounds = array<i64: 16, 32>}, {pipeline_mode = #tpu.pipeline_mode<synchronous>, transform_indices = @transform_1, window_bounds = array<i64: 1, 32>}, {pipeline_mode = #tpu.pipeline_mode<synchronous>, transform_indices = @transform_2, window_bounds = array<i64: 1, 32>}, {transform_indices = @transform_3, window_bounds = array<i64: 16, 32>}]} {
    %c0 = arith.constant 0 : index
    %c0_0 = arith.constant 0 : index
    %0 = vector.load %arg1[%c0, %c0_0] : memref<16x32xf32, #tpu.memory_space<vmem>>, vector<16x32xf32>
    %cst = arith.constant dense<0.000000e+00> : vector<16xf32>
    %1 = vector.multi_reduction <add>, %0, %cst [1] : vector<16x32xf32> to vector<16xf32>
    %2 = vector.shape_cast %1 : vector<16xf32> to vector<16x1xf32>
    %cst_1 = arith.constant 3.200000e+01 : f32
    %3 = vector.broadcast %cst_1 : f32 to vector<16x1xf32>
    %4 = arith.divf %2, %3 : vector<16x1xf32>
    %5 = vector.broadcast %4 : vector<16x1xf32> to vector<16x32xf32>
    %6 = arith.subf %0, %5 : vector<16x32xf32>
    %7 = arith.mulf %6, %6 : vector<16x32xf32>
    %cst_2 = arith.constant dense<0.000000e+00> : vector<16xf32>
    %8 = vector.multi_reduction <add>, %7, %cst_2 [1] : vector<16x32xf32> to vector<16xf32>
    %9 = vector.shape_cast %8 : vector<16xf32> to vector<16x1xf32>
    %cst_3 = arith.constant 3.200000e+01 : f32
    %10 = vector.broadcast %cst_3 : f32 to vector<16x1xf32>
    %11 = arith.divf %9, %10 : vector<16x1xf32>
    %cst_4 = arith.constant 9.99999996E-13 : f32
    %12 = vector.broadcast %cst_4 : f32 to vector<16x1xf32>
    %13 = arith.addf %11, %12 : vector<16x1xf32>
    %14 = math.rsqrt %13 : vector<16x1xf32>
    %15 = vector.broadcast %14 : vector<16x1xf32> to vector<16x32xf32>
    %16 = arith.mulf %6, %15 : vector<16x32xf32>
    %c0_5 = arith.constant 0 : index
    %c0_6 = arith.constant 0 : index
    %17 = vector.load %arg2[%c0_5, %c0_6] : memref<1x32xf32, #tpu.memory_space<vmem>>, vector<1x32xf32>
    %18 = vector.broadcast %17 : vector<1x32xf32> to vector<16x32xf32>
    %19 = arith.mulf %16, %18 : vector<16x32xf32>
    %c0_7 = arith.constant 0 : index
    %c0_8 = arith.constant 0 : index
    %20 = vector.load %arg3[%c0_7, %c0_8] : memref<1x32xf32, #tpu.memory_space<vmem>>, vector<1x32xf32>
    %21 = vector.broadcast %20 : vector<1x32xf32> to vector<16x32xf32>
    %22 = arith.addf %19, %21 : vector<16x32xf32>
    %c0_9 = arith.constant 0 : index
    %c0_10 = arith.constant 0 : index
    %23 = vector.load %arg4[%c0_9, %c0_10] : memref<16x32xf32, #tpu.memory_space<vmem>>, vector<16x32xf32>
    tpu.vector_store %arg4[%c0_9, %c0_10], %22 {strides = array<i32>} : memref<16x32xf32, #tpu.memory_space<vmem>>, vector<16x32xf32>,
    return
  }
  func.func @transform_0(%arg0: i32) -> (i32, i32) {
    %c0_i32 = arith.constant 0 : i32
    %c0_i32_0 = arith.constant 0 : i32
    return %arg0, %c0_i32 : i32, i32
  }
  func.func @transform_1(%arg0: i32) -> (i32, i32) {
    %c0_i32 = arith.constant 0 : i32
    %c0_i32_0 = arith.constant 0 : i32
    %c0_i32_1 = arith.constant 0 : i32
    return %c0_i32, %c0_i32_0 : i32, i32
  }
  func.func @transform_2(%arg0: i32) -> (i32, i32) {
    %c0_i32 = arith.constant 0 : i32
    %c0_i32_0 = arith.constant 0 : i32
    %c0_i32_1 = arith.constant 0 : i32
    return %c0_i32, %c0_i32_0 : i32, i32
  }
  func.func @transform_3(%arg0: i32) -> (i32, i32) {
    %c0_i32 = arith.constant 0 : i32
    %c0_i32_0 = arith.constant 0 : i32
    return %arg0, %c0_i32 : i32, i32
  }
}

</mosaic_0001>

<llo_original>
// kernel: tpu_custom_call.1
$region0: #{tpu_custom_call.1}
  #allocation0 [shape = 'u32[]', space=smem, size = 0x4, offset = 0x4, fixed_abs, tag = 'smem constant byte address 0x4 - core index']
  #allocation1 [shape = 'u32[72,128]{1,0:T(1,128)}', space=vmem, size = 0x9000, scoped, tag = 'internal scratch']
  %s0 = inlined_call_operand.hbm [shape: f32[16,32], index: 0, kind: input, shape index: {}]
  %s1 = inlined_call_operand.hbm [shape: f32[1,32], index: 1, kind: input, shape index: {}]
  %s2 = inlined_call_operand.vmem [shape: f32[1,32], index: 2, kind: input, shape index: {}]
  %s3 = inlined_call_operand.hbm [shape: f32[16,32], index: 3, kind: output, shape index: {}]
  %s4 = sld [smem:[#allocation0]]
  $region30: #{tpu_custom_call.1} parent=0
    _
  %s6 = ssub.s32 1, %s4
  %s7 = scalar_select 0, %s6, %s4
  $region1: #{tpu_custom_call.1} parent=0
    #allocation2 [shape = 'u8[8192]{0}', space=vmem, size = 0x2000, scoped, tag = 'input window, operand 0, single buffered']
    #allocation3 [shape = 's32[1]{0}', space=sflag, size = 0x4, scoped, tag = 'scoped memory for tpu_custom_call.1']
    #allocation4 [shape = 's32[1]{0}', space=sflag, size = 0x4, scoped, tag = 'scoped memory for tpu_custom_call.1']
    #allocation5 [shape = 'u8[512]{0}', space=vmem, size = 0x400, scoped, tag = 'input window, operand 1, single buffered']
    #allocation6 [shape = 's32[1]{0}', space=sflag, size = 0x4, scoped, tag = 'scoped memory for tpu_custom_call.1']
    #allocation7 [shape = 'u8[8192]{0}', space=vmem, size = 0x2000, scoped, tag = 'output window, operand 0, single buffered']
    %8 = vsyncpa [#allocation3], 0
    %9 = vsyncpa [#allocation6], 0
    %10 = vsyncpa [#allocation4], 0
    // Predicated region
    $region2: #{tpu_custom_call.1} parent=1 // pred_check
      _
    $region3: #{tpu_custom_call.1} parent=1 // pred_check_branch
      %12 = sbr.rel (0) target = $region5
    $region4: #{tpu_custom_call.1} parent=1 // pred_region
      %14 = vsyncadd [#allocation3], 0
      %s15 = sshll.u32 %s0, 4
      %s16 = int_to_ptr.hbm [resolvable:$true] %s15
      %s17 = sshll.u32 [#allocation2], 4
      %s18 = int_to_ptr.vmem [resolvable:$true] %s17
      %23 = dma.hbm_to_vmem [thread:$0]  %s16, 256, %s18, [#allocation3], 128, 128, 8
    $region5: #{tpu_custom_call.1} parent=1 // pred_fallthru
      _
    // Predicated region
    $region6: #{tpu_custom_call.1} parent=1 // pred_check
      _
    $region7: #{tpu_custom_call.1} parent=1 // pred_check_branch
      %25 = sbr.rel (0) target = $region9
    $region8: #{tpu_custom_call.1} parent=1 // pred_region
      %27 = vsyncadd [#allocation6], 0
      %s29 = sshll.u32 %s1, 4
      %s30 = int_to_ptr.hbm [resolvable:$true] %s29
      %s31 = sshll.u32 [#allocation5], 4
      %s32 = int_to_ptr.vmem [resolvable:$true] %s31
      %34 = dma.hbm_to_vmem [thread:$0]  %s30, 16, %s32, [#allocation6]
    $region9: #{tpu_custom_call.1} parent=1 // pred_fallthru
      _
    // Predicated region
    $region10: #{tpu_custom_call.1} parent=1 // pred_check
      _
    $region11: #{tpu_custom_call.1} parent=1 // pred_check_branch
      %36 = sbr.rel (0) target = $region13
    $region12: #{tpu_custom_call.1} parent=1 // pred_region
      _
    $region13: #{tpu_custom_call.1} parent=1 // pred_fallthru
      _
    // Predicated region
    $region14: #{tpu_custom_call.1} parent=1 // pred_check
      _
    $region15: #{tpu_custom_call.1} parent=1 // pred_check_branch
      %38 = sbr.rel (0) target = $region17
    $region16: #{tpu_custom_call.1} parent=1 // pred_region
      %40 = dma.done [#allocation3], 256
    $region17: #{tpu_custom_call.1} parent=1 // pred_fallthru
      _
    // Predicated region
    $region18: #{tpu_custom_call.1} parent=1 // pred_check
      _
    $region19: #{tpu_custom_call.1} parent=1 // pred_check_branch
      %42 = sbr.rel (0) target = $region21
    $region20: #{tpu_custom_call.1} parent=1 // pred_region
      %44 = dma.done [#allocation6], 16
    $region21: #{tpu_custom_call.1} parent=1 // pred_fallthru
      _
    %v45 = vld [vmem:[#allocation2] sm:$0xff]
    %v46 = vld [vmem:[#allocation2 + $0x8] sm:$0xff]
    %vm47 = vcmask 261120
    %v48 = vsel %vm47, %v45, 0.0
    %49 = vadd.xlane.f32.xlu0 %v48
    %v50 = vpop.xlane.xlu0 %49
    %v51 = vsel %vm47, %v46, 0.0
    %52 = vadd.xlane.f32.xlu0 %v51
    %v53 = vpop.xlane.xlu0 %52
    %v54 = vrcp.pop 32.0
    %v55 = vmul.f32 32.0, %v54
    %v56 = vsub.f32 1.0, %v55
    %v57 = vmul.f32 %v54, %v56
    %v58 = vadd.f32 %v54, %v57
    %vm59 = vweird.f32 %v54
    %v60 = vsel %vm59, %v54, %v58
    %v61 = vmul.f32 %v50, %v60
    %v62 = vmul.f32 %v53, %v60
    %v63 = vsub.f32 %v45, %v61
    %v64 = vsub.f32 %v46, %v62
    %v65 = vmul.f32 %v63, %v63
    %v66 = vmul.f32 %v64, %v64
    %v67 = vsel %vm47, %v65, 0.0
    %68 = vadd.xlane.f32.xlu0 %v67
    %v69 = vpop.xlane.xlu0 %68
    %v70 = vsel %vm47, %v66, 0.0
    %71 = vadd.xlane.f32.xlu0 %v70
    %v72 = vpop.xlane.xlu0 %71
    %v73 = vmul.f32 %v69, %v60
    %v74 = vmul.f32 %v72, %v60
    %v75 = vadd.f32 %v73, 1e-12
    %v76 = vadd.f32 %v74, 1e-12
    %v77 = vrsqrt.pop %v75
    %v78 = vmul.f32 %v77, %v75
    %v79 = vmul.f32 %v78, %v77
    %v80 = vmul.f32 0.5, %v79
    %v81 = vsub.f32 1.5, %v80
    %v82 = vmul.f32 %v77, %v81
    %vm83 = vweird.f32 %v75
    %vm84 = vweird.f32 %v77
    %vm85 = vmor %vm83, %vm84
    %v86 = vsel %vm85, %v77, %v82
    %v87 = vrsqrt.pop %v76
    %v88 = vmul.f32 %v87, %v76
    %v89 = vmul.f32 %v88, %v87
    %v90 = vmul.f32 0.5, %v89
    %v91 = vsub.f32 1.5, %v90
    %v92 = vmul.f32 %v87, %v91
    %vm93 = vweird.f32 %v76
    %vm94 = vweird.f32 %v87
    %vm95 = vmor %vm93, %vm94
    %v96 = vsel %vm95, %v87, %v92
    %v97 = vmul.f32 %v63, %v86
    %v98 = vmul.f32 %v64, %v96
    %v99 = vld [vmem:[#allocation5] sm:$0x1]
    %v101 = vperm.slane %v99, 0
    %v103 = vmul.f32 %v97, %v101
    %v104 = vmul.f32 %v98, %v101
    %v105 = vld [vmem:[%s2] sm:$0x1]
    %v107 = vperm.slane %v105, 0
    %v109 = vadd.f32 %v103, %v107
    %v110 = vadd.f32 %v104, %v107
    %111 = vst.msk [vmem:[#allocation7] sm:$0xff] %vm47, %v109
    %112 = vst.msk [vmem:[#allocation7 + $0x8] sm:$0xff] %vm47, %v110
    // Predicated region
    $region22: #{tpu_custom_call.1} parent=1 // pred_check
      _
    $region23: #{tpu_custom_call.1} parent=1 // pred_check_branch
      %114 = sbr.rel (0) target = $region25
    $region24: #{tpu_custom_call.1} parent=1 // pred_region
      %116 = vsyncadd [#allocation4], 0
      %s117 = sshll.u32 [#allocation7], 4
      %s118 = int_to_ptr.vmem [resolvable:$true] %s117
      %s119 = sshll.u32 %s3, 4
      %s120 = int_to_ptr.hbm [resolvable:$true] %s119
      %125 = dma.vmem_to_hbm [thread:$0]  %s118, 256, %s120, [#allocation4], 128, 128, 8
    $region25: #{tpu_custom_call.1} parent=1 // pred_fallthru
      _
    // Predicated region
    $region26: #{tpu_custom_call.1} parent=1 // pred_check
      _
    $region27: #{tpu_custom_call.1} parent=1 // pred_check_branch
      %127 = sbr.rel (0) target = $region29
    $region28: #{tpu_custom_call.1} parent=1 // pred_region
      %129 = dma.done [#allocation4], 256
    $region29: #{tpu_custom_call.1} parent=1 // pred_fallthru
      _
    %130 = vsyncpa [#allocation3], 1
    %131 = vsyncpa [#allocation6], 1
    %132 = vsyncpa [#allocation4], 1

</llo_original>
